<compile_context>
chip_gen: v7x
topology: tpu7x:2x2x1
jax: 0.10.0
libtpu: 0.0.40
codegen_flags: <defaults>
</compile_context>

<pallas_src>
import functools

import jax
import jax.numpy as jnp
from jax.experimental import pallas as pl
from jax.experimental.pallas import tpu as pltpu

HP = 128  # padded hidden / section lane width


def worker_kernel(z_ref, hc_ref, mask_ref, w_rnn_ref, b_rnn_ref,
                  w_head_ref, consts_ref, out_ref, *, num_actions):
    D = z_ref.shape[1]

    z = z_ref[...]                         # (B, D)
    mask = mask_ref[...]                   # (B, 1) broadcast over lanes
    hc = hc_ref[...]                       # (B, 2*HP) = [hx_pad | cx_pad]
    h = mask * hc[:, :HP]
    c = mask * hc[:, HP:]

    # --- LSTMCell gates: (B, 4*HP), each gate in its own 128-lane section -----
    gates = (jnp.dot(z, w_rnn_ref[0:D, :], preferred_element_type=jnp.float32)
             + jnp.dot(h, w_rnn_ref[D:, :], preferred_element_type=jnp.float32)
             + b_rnn_ref[...])

    # PyTorch LSTMCell gate order: input, forget, cell(g), output
    i_g = jax.nn.sigmoid(gates[:, 0 * HP:1 * HP])
    f_g = jax.nn.sigmoid(gates[:, 1 * HP:2 * HP])
    g_g = jnp.tanh(gates[:, 2 * HP:3 * HP])
    o_g = jax.nn.sigmoid(gates[:, 3 * HP:4 * HP])

    # padded lanes stay exactly 0: 0.5*0 + 0.5*0 = 0 ; 0.5*tanh(0) = 0
    c_new = f_g * c + i_g * g_g            # (B, HP)
    u = o_g * jnp.tanh(c_new)              # (B, HP)

    # --- fused head matmul: [policy logits | critic hidden] in one MXU pass ----
    head = (jnp.dot(u, w_head_ref[...], preferred_element_type=jnp.float32)
            + consts_ref[0:1, :])          # (B, 2*HP); lanes 128:128+50 carry bc1

    # policy: softmax over the real action lanes only
    logits = head[:, 0:HP]
    lane = jax.lax.broadcasted_iota(jnp.int32, logits.shape, 1)
    logits = jnp.where(lane < num_actions, logits, -jnp.inf)
    m = jnp.max(logits, axis=-1, keepdims=True)
    e = jnp.exp(logits - m)
    a = e * pl.reciprocal(jnp.sum(e, axis=-1, keepdims=True), approx=False)

    # critic layer 2 as VPU multiply + lane reduction (no 1-lane MXU matmul)
    h1 = jnp.maximum(head[:, HP:2 * HP], 0.0)      # padded lanes are relu(0) = 0
    wc2_row = consts_ref[1:2, 0:HP]                # (1, HP)  zero-padded beyond 50
    bc2_row = consts_ref[1:2, HP:2 * HP]           # (1, HP)  bc2 broadcast
    v = jnp.sum(h1 * wc2_row, axis=-1, keepdims=True) + bc2_row   # (B, HP)

    # single lane-dense (B, 512) store; wrapper slices the real columns out
    out_ref[...] = jnp.concatenate([a, u, c_new, v], axis=-1)


def pack_params(params, d):
    """One-time weight packing: transpose, fuse biases, zero-pad to 128-lane sections."""
    H = params["Whh"].shape[1]
    A = params["Wphi"].shape[0]
    CH = params["Wc1"].shape[0]

    wih_t = params["Wih"].T.astype(jnp.float32)    # (D, 4H)
    whh_t = params["Whh"].T.astype(jnp.float32)    # (H, 4H)
    b_fused = (params["bih"] + params["bhh"]).astype(jnp.float32)

    w_rnn = jnp.zeros((d + HP, 4 * HP), jnp.float32)
    b_rnn = jnp.zeros((1, 4 * HP), jnp.float32)
    for g in range(4):
        w_rnn = w_rnn.at[:d, g * HP:g * HP + H].set(wih_t[:, g * H:(g + 1) * H])
        w_rnn = w_rnn.at[d:d + H, g * HP:g * HP + H].set(whh_t[:, g * H:(g + 1) * H])
        b_rnn = b_rnn.at[0, g * HP:g * HP + H].set(b_fused[g * H:(g + 1) * H])

    # head slab: lanes [0, A) = Wphi^T ; lanes [128, 128+CH) = Wc1^T
    w_head = jnp.zeros((HP, 2 * HP), jnp.float32)
    w_head = w_head.at[:H, 0:A].set(params["Wphi"].T.astype(jnp.float32))
    w_head = w_head.at[:H, HP:HP + CH].set(params["Wc1"].T.astype(jnp.float32))

    # consts: row 0 = head bias (zeros for phi | bc1 padded);
    #         row 1 = [wc2 padded to 128 | bc2 broadcast to 128]
    consts = jnp.zeros((2, 2 * HP), jnp.float32)
    consts = consts.at[0, HP:HP + CH].set(params["bc1"].astype(jnp.float32))
    consts = consts.at[1, 0:CH].set(params["Wc2"].reshape(-1).astype(jnp.float32))
    consts = consts.at[1, HP:2 * HP].set(jnp.full((HP,), params["bc2"][0], jnp.float32))

    return {"w_rnn": w_rnn, "b_rnn": b_rnn, "w_head": w_head, "consts": consts,
            "D": d, "H": H, "A": A}


def worker_forward(z, goals, hidden, mask, packed):
    """Forward pass. All per-call work outside the kernel is activation-scale only."""
    del goals  # unused by the PyTorch forward as well
    hx, cx = hidden
    B = z.shape[0]
    H, A = packed["H"], packed["A"]

    # pad + pack the hidden state (in a rollout you would keep hc packed and skip this)
    hc = jnp.zeros((B, 2 * HP), jnp.float32)
    hc = hc.at[:, :H].set(hx).at[:, HP:HP + H].set(cx)

    vmem = pl.BlockSpec(memory_space=pltpu.MemorySpace.VMEM)
    out = pl.pallas_call(
        functools.partial(worker_kernel, num_actions=A),
        out_shape=jax.ShapeDtypeStruct((B, 4 * HP), jnp.float32),
        in_specs=[vmem] * 7,
        out_specs=vmem,
    )(z, hc, mask, packed["w_rnn"], packed["b_rnn"], packed["w_head"], packed["consts"])

    a = out[:, 0:A]
    u = out[:, HP:HP + H]
    c_new = out[:, 2 * HP:2 * HP + H]
    v = out[:, 3 * HP:3 * HP + 1]
    return a, (u, c_new), v


def init_params(key, d, k, num_actions):
    """Deterministic synthetic init matching PyTorch default U(-1/sqrt(fan), 1/sqrt(fan))."""
    H = k * num_actions
    ks = jax.random.split(key, 9)
    s_lstm = 1.0 / jnp.sqrt(H)
    s_c1 = 1.0 / jnp.sqrt(H)
    s_c2 = 1.0 / jnp.sqrt(50)
    u = lambda kk, shape, s: jax.random.uniform(kk, shape, jnp.float32, -s, s)
    return {
        "Wih": u(ks[0], (4 * H, d), s_lstm),
        "Whh": u(ks[1], (4 * H, H), s_lstm),
        "bih": u(ks[2], (4 * H,), s_lstm),
        "bhh": u(ks[3], (4 * H,), s_lstm),
        "Wphi": u(ks[4], (num_actions, H), s_lstm),   # Linear(H, A, bias=False)
        "Wc1": u(ks[5], (50, H), s_c1),
        "bc1": u(ks[6], (50,), s_c1),
        "Wc2": u(ks[7], (1, 50), s_c2),
        "bc2": u(ks[8], (1,), s_c2),
    }


def reference_forward(z, hidden, mask, params):
    """Pure-JAX reference of the PyTorch semantics (for sanity checking)."""
    hx, cx = hidden
    h = mask * hx
    c = mask * cx
    H = hx.shape[1]
    gates = (z @ params["Wih"].T + params["bih"]
             + h @ params["Whh"].T + params["bhh"])
    i = jax.nn.sigmoid(gates[:, 0 * H:1 * H])
    f = jax.nn.sigmoid(gates[:, 1 * H:2 * H])
    g = jnp.tanh(gates[:, 2 * H:3 * H])
    o = jax.nn.sigmoid(gates[:, 3 * H:4 * H])
    c_new = f * c + i * g
    u = o * jnp.tanh(c_new)
    w = u @ params["Wphi"].T
    a = jax.nn.softmax(w, axis=-1)
    v = jnp.maximum(u @ params["Wc1"].T + params["bc1"], 0.0) @ params["Wc2"].T + params["bc2"]
    return a, (u, c_new), v


if __name__ == "__main__":
    # small shapes consistent with the module: b=batch, d=latent dim, k, num_actions
    b, c_horizon, d, k, num_actions = 4, 3, 32, 4, 6
    H = k * num_actions

    key = jax.random.PRNGKey(0)
    k_param, k_z, k_h, k_c, k_g = jax.random.split(key, 5)

    params = init_params(k_param, d, k, num_actions)
    packed = pack_params(params, d)          # one-time packing (init-time, not per call)

    z = jax.random.normal(k_z, (b, d), jnp.float32)
    hx = jax.random.normal(k_h, (b, H), jnp.float32)
    cx = jax.random.normal(k_c, (b, H), jnp.float32)
    goals = [jax.random.normal(jax.random.fold_in(k_g, i), (b, d), jnp.float32)
             for i in range(c_horizon)]      # unused by forward (matches PyTorch)
    mask = jnp.ones((b, 1), jnp.float32)

    a, (u, c_new), v = worker_forward(z, goals, (hx, cx), mask, packed)
    jax.block_until_ready((a, u, c_new, v))

    # sanity check against pure-JAX reference
    a_r, (u_r, c_r), v_r = reference_forward(z, (hx, cx), mask, params)
    assert jnp.allclose(a, a_r, atol=1e-5), "policy mismatch"
    assert jnp.allclose(u, u_r, atol=1e-5), "hidden mismatch"
    assert jnp.allclose(c_new, c_r, atol=1e-5), "cell mismatch"
    assert jnp.allclose(v, v_r, atol=1e-5), "value mismatch"
    assert jnp.allclose(jnp.sum(a, axis=-1), 1.0, atol=1e-5), "softmax not normalized"

    # TODO(synk): intrinsic_reward() (cosine-similarity horizon scan) is a separate
    # method, not part of forward(), and is not implemented here.

    print("KERNEL_OK")
</pallas_src>

<mosaic_0001>
module attributes {stable_mosaic.version = 11 : i64} {
  func.func @worker_kernel(%arg0: memref<4x32xf32, #tpu.memory_space<vmem>>, %arg1: memref<4x256xf32, #tpu.memory_space<vmem>>, %arg2: memref<4x1xf32, #tpu.memory_space<vmem>>, %arg3: memref<160x512xf32, #tpu.memory_space<vmem>>, %arg4: memref<1x512xf32, #tpu.memory_space<vmem>>, %arg5: memref<128x256xf32, #tpu.memory_space<vmem>>, %arg6: memref<2x256xf32, #tpu.memory_space<vmem>>, %arg7: memref<4x512xf32, #tpu.memory_space<vmem>>) attributes {dimension_semantics = [], scalar_prefetch = 0 : i64, scratch_operands = 0 : i64, tpu.core_type = #tpu.core_type<tc>} {
    %c0 = arith.constant 0 : index
    %c0_0 = arith.constant 0 : index
    %0 = vector.load %arg0[%c0, %c0_0] : memref<4x32xf32, #tpu.memory_space<vmem>>, vector<4x32xf32>
    %c0_1 = arith.constant 0 : index
    %c0_2 = arith.constant 0 : index
    %1 = vector.load %arg2[%c0_1, %c0_2] : memref<4x1xf32, #tpu.memory_space<vmem>>, vector<4x1xf32>
    %c0_3 = arith.constant 0 : index
    %c0_4 = arith.constant 0 : index
    %2 = vector.load %arg1[%c0_3, %c0_4] : memref<4x256xf32, #tpu.memory_space<vmem>>, vector<4x256xf32>
    %3 = vector.extract_strided_slice %2 {offsets = [0, 0], sizes = [4, 128], strides = [1, 1]} : vector<4x256xf32> to vector<4x128xf32>
    %4 = vector.broadcast %1 : vector<4x1xf32> to vector<4x128xf32>
    %5 = arith.mulf %4, %3 : vector<4x128xf32>
    %6 = vector.extract_strided_slice %2 {offsets = [0, 128], sizes = [4, 128], strides = [1, 1]} : vector<4x256xf32> to vector<4x128xf32>
    %7 = vector.broadcast %1 : vector<4x1xf32> to vector<4x128xf32>
    %8 = arith.mulf %7, %6 : vector<4x128xf32>
    %c0_5 = arith.constant 0 : index
    %c0_6 = arith.constant 0 : index
    %9 = vector.load %arg3[%c0_5, %c0_6] : memref<160x512xf32, #tpu.memory_space<vmem>>, vector<32x512xf32>
    %cst = arith.constant dense<0.000000e+00> : vector<4x512xf32>
    %10 = tpu.matmul %0, %9, %cst {dimension_numbers = #tpu.dot_dimension_numbers<[1], [0], [0], [1], [0, 0, 1, 1], [], []>} : vector<4x32xf32>, vector<32x512xf32>, vector<4x512xf32> -> vector<4x512xf32>
    %c32 = arith.constant 32 : index
    %c0_7 = arith.constant 0 : index
    %11 = vector.load %arg3[%c32, %c0_7] : memref<160x512xf32, #tpu.memory_space<vmem>>, vector<128x512xf32>
    %cst_8 = arith.constant dense<0.000000e+00> : vector<4x512xf32>
    %12 = tpu.matmul %5, %11, %cst_8 {dimension_numbers = #tpu.dot_dimension_numbers<[1], [0], [0], [1], [0, 0, 1, 1], [], []>} : vector<4x128xf32>, vector<128x512xf32>, vector<4x512xf32> -> vector<4x512xf32>
    %13 = arith.addf %10, %12 : vector<4x512xf32>
    %c0_9 = arith.constant 0 : index
    %c0_10 = arith.constant 0 : index
    %14 = vector.load %arg4[%c0_9, %c0_10] : memref<1x512xf32, #tpu.memory_space<vmem>>, vector<1x512xf32>
    %15 = vector.broadcast %14 : vector<1x512xf32> to vector<4x512xf32>
    %16 = arith.addf %13, %15 : vector<4x512xf32>
    %17 = vector.extract_strided_slice %16 {offsets = [0, 0], sizes = [4, 128], strides = [1, 1]} : vector<4x512xf32> to vector<4x128xf32>
    %18 = arith.negf %17 : vector<4x128xf32>
    %19 = math.exp %18 : vector<4x128xf32>
    %cst_11 = arith.constant 1.000000e+00 : f32
    %20 = vector.broadcast %cst_11 : f32 to vector<4x128xf32>
    %21 = arith.addf %20, %19 : vector<4x128xf32>
    %22 = arith.divf %20, %21 : vector<4x128xf32>
    %23 = vector.extract_strided_slice %16 {offsets = [0, 128], sizes = [4, 128], strides = [1, 1]} : vector<4x512xf32> to vector<4x128xf32>
    %24 = arith.negf %23 : vector<4x128xf32>
    %25 = math.exp %24 : vector<4x128xf32>
    %cst_12 = arith.constant 1.000000e+00 : f32
    %26 = vector.broadcast %cst_12 : f32 to vector<4x128xf32>
    %27 = arith.addf %26, %25 : vector<4x128xf32>
    %28 = arith.divf %26, %27 : vector<4x128xf32>
    %29 = vector.extract_strided_slice %16 {offsets = [0, 256], sizes = [4, 128], strides = [1, 1]} : vector<4x512xf32> to vector<4x128xf32>
    %30 = math.tanh %29 : vector<4x128xf32>
    %31 = vector.extract_strided_slice %16 {offsets = [0, 384], sizes = [4, 128], strides = [1, 1]} : vector<4x512xf32> to vector<4x128xf32>
    %32 = arith.negf %31 : vector<4x128xf32>
    %33 = math.exp %32 : vector<4x128xf32>
    %cst_13 = arith.constant 1.000000e+00 : f32
    %34 = vector.broadcast %cst_13 : f32 to vector<4x128xf32>
    %35 = arith.addf %34, %33 : vector<4x128xf32>
    %36 = arith.divf %34, %35 : vector<4x128xf32>
    %37 = arith.mulf %28, %8 : vector<4x128xf32>
    %38 = arith.mulf %22, %30 : vector<4x128xf32>
    %39 = arith.addf %37, %38 : vector<4x128xf32>
    %40 = math.tanh %39 : vector<4x128xf32>
    %41 = arith.mulf %36, %40 : vector<4x128xf32>
    %c0_14 = arith.constant 0 : index
    %c0_15 = arith.constant 0 : index
    %42 = vector.load %arg5[%c0_14, %c0_15] : memref<128x256xf32, #tpu.memory_space<vmem>>, vector<128x256xf32>
    %cst_16 = arith.constant dense<0.000000e+00> : vector<4x256xf32>
    %43 = tpu.matmul %41, %42, %cst_16 {dimension_numbers = #tpu.dot_dimension_numbers<[1], [0], [0], [1], [0, 0, 1, 1], [], []>} : vector<4x128xf32>, vector<128x256xf32>, vector<4x256xf32> -> vector<4x256xf32>
    %c0_17 = arith.constant 0 : index
    %c0_18 = arith.constant 0 : index
    %44 = vector.load %arg6[%c0_17, %c0_18] : memref<2x256xf32, #tpu.memory_space<vmem>>, vector<1x256xf32>
    %45 = vector.broadcast %44 : vector<1x256xf32> to vector<4x256xf32>
    %46 = arith.addf %43, %45 : vector<4x256xf32>
    %47 = vector.extract_strided_slice %46 {offsets = [0, 0], sizes = [4, 128], strides = [1, 1]} : vector<4x256xf32> to vector<4x128xf32>
    %48 = tpu.iota {dimensions = array<i32: 1>} : vector<4x128xi32>
    %c6_i32 = arith.constant 6 : i32
    %49 = vector.broadcast %c6_i32 : i32 to vector<4x128xi32>
    %50 = arith.cmpi slt, %48, %49 : vector<4x128xi32>
    %cst_19 = arith.constant 0xFF800000 : f32
    %51 = vector.broadcast %cst_19 : f32 to vector<4x128xf32>
    %52 = arith.select %50, %47, %51 : vector<4x128xi1>, vector<4x128xf32>
    %cst_20 = arith.constant dense<0xFF800000> : vector<4xf32>
    %53 = vector.multi_reduction <maximumf>, %52, %cst_20 [1] : vector<4x128xf32> to vector<4xf32>
    %54 = vector.shape_cast %53 : vector<4xf32> to vector<4x1xf32>
    %55 = vector.broadcast %54 : vector<4x1xf32> to vector<4x128xf32>
    %56 = arith.subf %52, %55 : vector<4x128xf32>
    %57 = math.exp %56 : vector<4x128xf32>
    %cst_21 = arith.constant dense<0.000000e+00> : vector<4xf32>
    %58 = vector.multi_reduction <add>, %57, %cst_21 [1] : vector<4x128xf32> to vector<4xf32>
    %59 = vector.shape_cast %58 : vector<4xf32> to vector<4x1xf32>
    %60 = tpu.reciprocal %59 : vector<4x1xf32> -> vector<4x1xf32>
    %61 = vector.broadcast %60 : vector<4x1xf32> to vector<4x128xf32>
    %62 = arith.mulf %57, %61 : vector<4x128xf32>
    %63 = vector.extract_strided_slice %46 {offsets = [0, 128], sizes = [4, 128], strides = [1, 1]} : vector<4x256xf32> to vector<4x128xf32>
    %cst_22 = arith.constant 0.000000e+00 : f32
    %64 = vector.broadcast %cst_22 : f32 to vector<4x128xf32>
    %65 = arith.maximumf %63, %64 : vector<4x128xf32>
    %c1 = arith.constant 1 : index
    %c0_23 = arith.constant 0 : index
    %66 = vector.load %arg6[%c1, %c0_23] : memref<2x256xf32, #tpu.memory_space<vmem>>, vector<1x128xf32>
    %c1_24 = arith.constant 1 : index
    %c128 = arith.constant 128 : index
    %67 = vector.load %arg6[%c1_24, %c128] : memref<2x256xf32, #tpu.memory_space<vmem>>, vector<1x128xf32>
    %68 = vector.broadcast %66 : vector<1x128xf32> to vector<4x128xf32>
    %69 = arith.mulf %65, %68 : vector<4x128xf32>
    %cst_25 = arith.constant dense<0.000000e+00> : vector<4xf32>
    %70 = vector.multi_reduction <add>, %69, %cst_25 [1] : vector<4x128xf32> to vector<4xf32>
    %71 = vector.shape_cast %70 : vector<4xf32> to vector<4x1xf32>
    %72 = vector.broadcast %71 : vector<4x1xf32> to vector<4x128xf32>
    %73 = vector.broadcast %67 : vector<1x128xf32> to vector<4x128xf32>
    %74 = arith.addf %72, %73 : vector<4x128xf32>
    %75 = tpu.concatenate %62, %41, %39, %74 in 1 : vector<4x128xf32>, vector<4x128xf32>, vector<4x128xf32>, vector<4x128xf32> -> vector<4x512xf32>
    %c0_26 = arith.constant 0 : index
    %c0_27 = arith.constant 0 : index
    %76 = vector.load %arg7[%c0_26, %c0_27] : memref<4x512xf32, #tpu.memory_space<vmem>>, vector<4x512xf32>
    tpu.vector_store %arg7[%c0_26, %c0_27], %75 {strides = array<i32>} : memref<4x512xf32, #tpu.memory_space<vmem>>, vector<4x512xf32>,
    return
  }
}

</mosaic_0001>

<llo_original>
// kernel: tpu_custom_call.1
$region0: #{tpu_custom_call.1}
  #allocation0 [shape = 'u32[]', space=smem, size = 0x4, offset = 0x4, fixed_abs, tag = 'smem constant byte address 0x4 - core index']
  #allocation1 [shape = 'u32[144,128]{1,0:T(1,128)}', space=vmem, size = 0x12000, scoped, tag = 'internal scratch']
  %s0 = inlined_call_operand.hbm [shape: f32[4,32], index: 0, kind: input, shape index: {}]
  %s1 = inlined_call_operand.vmem [shape: f32[4,256], index: 1, kind: input, shape index: {}]
  %s2 = inlined_call_operand.vmem [shape: f32[4,1], index: 2, kind: input, shape index: {}]
  %s3 = inlined_call_operand.hbm [shape: f32[160,512], index: 3, kind: input, shape index: {}]
  %s4 = inlined_call_operand.vmem [shape: f32[1,512], index: 4, kind: input, shape index: {}]
  %s5 = inlined_call_operand.hbm [shape: f32[128,256], index: 5, kind: input, shape index: {}]
  %s6 = inlined_call_operand.vmem [shape: f32[2,256], index: 6, kind: input, shape index: {}]
  %s7 = inlined_call_operand.hbm [shape: f32[4,512], index: 7, kind: output, shape index: {}]
  %s8 = sld [smem:[#allocation0]]
  $region50: #{tpu_custom_call.1} parent=0
    _
  %s10 = ssub.s32 1, %s8
  %s11 = scalar_select 0, %s10, %s8
  $region1: #{tpu_custom_call.1} parent=0
    #allocation2 [shape = 'u8[2048]{0}', space=vmem, size = 0x800, scoped, tag = 'input window, operand 0, single buffered']
    #allocation3 [shape = 's32[1]{0}', space=sflag, size = 0x4, scoped, tag = 'scoped memory for tpu_custom_call.1']
    #allocation4 [shape = 's32[1]{0}', space=sflag, size = 0x4, scoped, tag = 'scoped memory for tpu_custom_call.1']
    #allocation5 [shape = 'u8[327680]{0}', space=vmem, size = 0x50000, scoped, tag = 'input window, operand 3, single buffered']
    #allocation6 [shape = 's32[1]{0}', space=sflag, size = 0x4, scoped, tag = 'scoped memory for tpu_custom_call.1']
    #allocation7 [shape = 'u8[131072]{0}', space=vmem, size = 0x20000, scoped, tag = 'input window, operand 5, single buffered']
    #allocation8 [shape = 'u8[8192]{0}', space=vmem, size = 0x2000, scoped, tag = 'output window, operand 0, single buffered']
    %12 = vsyncpa [#allocation3], 0
    %13 = vsyncpa [#allocation6], 0
    %14 = vsyncpa [#allocation4], 0
    // Predicated region
    $region2: #{tpu_custom_call.1} parent=1 // pred_check
      _
    $region3: #{tpu_custom_call.1} parent=1 // pred_check_branch
      %16 = sbr.rel (0) target = $region5
    $region4: #{tpu_custom_call.1} parent=1 // pred_region
      %s18 = ssub.s32 64, 64
      %19 = vsyncadd [#allocation3], %s18
      %s21 = sshll.u32 [#allocation2], 4
      %s22 = int_to_ptr.vmem [resolvable:$true] %s21
      %24 = dma.hbm_to_vmem [thread:$0]  %s0, 64, %s22, [#allocation3]
    $region5: #{tpu_custom_call.1} parent=1 // pred_fallthru
      _
    // Predicated region
    $region6: #{tpu_custom_call.1} parent=1 // pred_check
      _
    $region7: #{tpu_custom_call.1} parent=1 // pred_check_branch
      %26 = sbr.rel (0) target = $region9
    $region8: #{tpu_custom_call.1} parent=1 // pred_region
      _
    $region9: #{tpu_custom_call.1} parent=1 // pred_fallthru
      _
    // Predicated region
    $region10: #{tpu_custom_call.1} parent=1 // pred_check
      _
    $region11: #{tpu_custom_call.1} parent=1 // pred_check_branch
      %28 = sbr.rel (0) target = $region13
    $region12: #{tpu_custom_call.1} parent=1 // pred_region
      _
    $region13: #{tpu_custom_call.1} parent=1 // pred_fallthru
      _
    // Predicated region
    $region14: #{tpu_custom_call.1} parent=1 // pred_check
      _
    $region15: #{tpu_custom_call.1} parent=1 // pred_check_branch
      %30 = sbr.rel (0) target = $region17
    $region16: #{tpu_custom_call.1} parent=1 // pred_region
      %s32 = ssub.s32 10240, 10240
      %33 = vsyncadd [#allocation6], %s32
      %s34 = sshll.u32 [#allocation5], 4
      %s35 = int_to_ptr.vmem [resolvable:$true] %s34
      %40 = dma.hbm_to_vmem [thread:$0]  %s3, 10240, %s35, [#allocation6], 512, 512, 32
    $region17: #{tpu_custom_call.1} parent=1 // pred_fallthru
      _
    // Predicated region
    $region18: #{tpu_custom_call.1} parent=1 // pred_check
      _
    $region19: #{tpu_custom_call.1} parent=1 // pred_check_branch
      %42 = sbr.rel (0) target = $region21
    $region20: #{tpu_custom_call.1} parent=1 // pred_region
      _
    $region21: #{tpu_custom_call.1} parent=1 // pred_fallthru
      _
    // Predicated region
    $region22: #{tpu_custom_call.1} parent=1 // pred_check
      _
    $region23: #{tpu_custom_call.1} parent=1 // pred_check_branch
      %44 = sbr.rel (0) target = $region25
    $region24: #{tpu_custom_call.1} parent=1 // pred_region
      %s46 = ssub.s32 4096, 4096
      %47 = vsyncadd [#allocation6], %s46
      %s48 = sshll.u32 [#allocation7], 4
      %s49 = int_to_ptr.vmem [resolvable:$true] %s48
      %54 = dma.hbm_to_vmem [thread:$0]  %s5, 4096, %s49, [#allocation6], 256, 256, 16
    $region25: #{tpu_custom_call.1} parent=1 // pred_fallthru
      _
    // Predicated region
    $region26: #{tpu_custom_call.1} parent=1 // pred_check
      _
    $region27: #{tpu_custom_call.1} parent=1 // pred_check_branch
      %56 = sbr.rel (0) target = $region29
    $region28: #{tpu_custom_call.1} parent=1 // pred_region
      _
    $region29: #{tpu_custom_call.1} parent=1 // pred_fallthru
      _
    // Predicated region
    $region30: #{tpu_custom_call.1} parent=1 // pred_check
      _
    $region31: #{tpu_custom_call.1} parent=1 // pred_check_branch
      %58 = sbr.rel (0) target = $region33
    $region32: #{tpu_custom_call.1} parent=1 // pred_region
      %59 = dma.done [#allocation3], 64
    $region33: #{tpu_custom_call.1} parent=1 // pred_fallthru
      _
    // Predicated region
    $region34: #{tpu_custom_call.1} parent=1 // pred_check
      _
    $region35: #{tpu_custom_call.1} parent=1 // pred_check_branch
      %61 = sbr.rel (0) target = $region37
    $region36: #{tpu_custom_call.1} parent=1 // pred_region
      %62 = dma.done [#allocation6], 10240
    $region37: #{tpu_custom_call.1} parent=1 // pred_fallthru
      _
    // Predicated region
    $region38: #{tpu_custom_call.1} parent=1 // pred_check
      _
    $region39: #{tpu_custom_call.1} parent=1 // pred_check_branch
      %64 = sbr.rel (0) target = $region41
    $region40: #{tpu_custom_call.1} parent=1 // pred_region
      %65 = dma.done [#allocation6], 4096
    $region41: #{tpu_custom_call.1} parent=1 // pred_fallthru
      _
    %v66 = vld [vmem:[#allocation2] sm:$0xf]
    %v67 = vld [vmem:[%s2] sm:$0xf]
    %v68 = vld [vmem:[%s1] sm:$0xff]
    %70 = vset.pattern.permute.xlu0 0
    %71 = vperm.xlu0 %70, %v67
    %v72 = vpop.permute.xlu0 %71
    %v74 = vmul.f32 %v72, %v68
    %v76 = vcombine.high %v68, %v68
    %v78 = vmul.f32 %v72, %v76
    %v79 = vld [vmem:[#allocation5] sm:$0xff]
    %v80 = vld [vmem:[#allocation5 + $0x8] sm:$0xff]
    %v81 = vld [vmem:[#allocation5 + $0x10] sm:$0xff]
    %v82 = vld [vmem:[#allocation5 + $0x18] sm:$0xff]
    %v83 = vld [vmem:[#allocation5 + $0x20] sm:$0xff]
    %v84 = vld [vmem:[#allocation5 + $0x28] sm:$0xff]
    %v85 = vld [vmem:[#allocation5 + $0x30] sm:$0xff]
    %v86 = vld [vmem:[#allocation5 + $0x38] sm:$0xff]
    %v87 = vld [vmem:[#allocation5 + $0x40] sm:$0xff]
    %v88 = vld [vmem:[#allocation5 + $0x48] sm:$0xff]
    %v89 = vld [vmem:[#allocation5 + $0x50] sm:$0xff]
    %v90 = vld [vmem:[#allocation5 + $0x58] sm:$0xff]
    %v91 = vld [vmem:[#allocation5 + $0x60] sm:$0xff]
    %v92 = vld [vmem:[#allocation5 + $0x68] sm:$0xff]
    %v93 = vld [vmem:[#allocation5 + $0x70] sm:$0xff]
    %v94 = vld [vmem:[#allocation5 + $0x78] sm:$0xff]
    %v95 = vld [vmem:[#allocation5 + $0x80] sm:$0xff]
    %v96 = vld [vmem:[#allocation5 + $0x88] sm:$0xff]
    %v97 = vld [vmem:[#allocation5 + $0x90] sm:$0xff]
    %v98 = vld [vmem:[#allocation5 + $0x98] sm:$0xff]
    %v99 = vld [vmem:[#allocation5 + $0xa0] sm:$0xff]
    %v100 = vld [vmem:[#allocation5 + $0xa8] sm:$0xff]
    %v101 = vld [vmem:[#allocation5 + $0xb0] sm:$0xff]
    %v102 = vld [vmem:[#allocation5 + $0xb8] sm:$0xff]
    %v103 = vld [vmem:[#allocation5 + $0xc0] sm:$0xff]
    %v104 = vld [vmem:[#allocation5 + $0xc8] sm:$0xff]
    %v105 = vld [vmem:[#allocation5 + $0xd0] sm:$0xff]
    %v106 = vld [vmem:[#allocation5 + $0xd8] sm:$0xff]
    %v107 = vld [vmem:[#allocation5 + $0xe0] sm:$0xff]
    %v108 = vld [vmem:[#allocation5 + $0xe8] sm:$0xff]
    %v109 = vld [vmem:[#allocation5 + $0xf0] sm:$0xff]
    %v110 = vld [vmem:[#allocation5 + $0xf8] sm:$0xff]
    %v111 = vld [vmem:[#allocation5 + $0x100] sm:$0xff]
    %v112 = vld [vmem:[#allocation5 + $0x108] sm:$0xff]
    %v113 = vld [vmem:[#allocation5 + $0x110] sm:$0xff]
    %v114 = vld [vmem:[#allocation5 + $0x118] sm:$0xff]
    %v115 = vld [vmem:[#allocation5 + $0x120] sm:$0xff]
    %v116 = vld [vmem:[#allocation5 + $0x128] sm:$0xff]
    %v117 = vld [vmem:[#allocation5 + $0x130] sm:$0xff]
    %v118 = vld [vmem:[#allocation5 + $0x138] sm:$0xff]
    %v119 = vld [vmem:[#allocation5 + $0x140] sm:$0xff]
    %v120 = vld [vmem:[#allocation5 + $0x148] sm:$0xff]
    %v121 = vld [vmem:[#allocation5 + $0x150] sm:$0xff]
    %v122 = vld [vmem:[#allocation5 + $0x158] sm:$0xff]
    %v123 = vld [vmem:[#allocation5 + $0x160] sm:$0xff]
    %v124 = vld [vmem:[#allocation5 + $0x168] sm:$0xff]
    %v125 = vld [vmem:[#allocation5 + $0x170] sm:$0xff]
    %v126 = vld [vmem:[#allocation5 + $0x178] sm:$0xff]
    %v127 = vld [vmem:[#allocation5 + $0x180] sm:$0xff]
    %v128 = vld [vmem:[#allocation5 + $0x188] sm:$0xff]
    %v129 = vld [vmem:[#allocation5 + $0x190] sm:$0xff]
    %v130 = vld [vmem:[#allocation5 + $0x198] sm:$0xff]
    %v131 = vld [vmem:[#allocation5 + $0x1a0] sm:$0xff]
    %v132 = vld [vmem:[#allocation5 + $0x1a8] sm:$0xff]
    %v133 = vld [vmem:[#allocation5 + $0x1b0] sm:$0xff]
    %v134 = vld [vmem:[#allocation5 + $0x1b8] sm:$0xff]
    %v135 = vld [vmem:[#allocation5 + $0x1c0] sm:$0xff]
    %v136 = vld [vmem:[#allocation5 + $0x1c8] sm:$0xff]
    %v137 = vld [vmem:[#allocation5 + $0x1d0] sm:$0xff]
    %v138 = vld [vmem:[#allocation5 + $0x1d8] sm:$0xff]
    %v139 = vld [vmem:[#allocation5 + $0x1e0] sm:$0xff]
    %v140 = vld [vmem:[#allocation5 + $0x1e8] sm:$0xff]
    %v141 = vld [vmem:[#allocation5 + $0x1f0] sm:$0xff]
    %v142 = vld [vmem:[#allocation5 + $0x1f8] sm:$0xff]
    %v143 = vld [vmem:[#allocation5 + $0x200] sm:$0xff]
    %v144 = vld [vmem:[#allocation5 + $0x208] sm:$0xff]
    %v145 = vld [vmem:[#allocation5 + $0x210] sm:$0xff]
    %v146 = vld [vmem:[#allocation5 + $0x218] sm:$0xff]
    %v147 = vld [vmem:[#allocation5 + $0x220] sm:$0xff]
    %v148 = vld [vmem:[#allocation5 + $0x228] sm:$0xff]
    %v149 = vld [vmem:[#allocation5 + $0x230] sm:$0xff]
    %v150 = vld [vmem:[#allocation5 + $0x238] sm:$0xff]
    %v151 = vld [vmem:[#allocation5 + $0x240] sm:$0xff]
    %v152 = vld [vmem:[#allocation5 + $0x248] sm:$0xff]
    %v153 = vld [vmem:[#allocation5 + $0x250] sm:$0xff]
    %v154 = vld [vmem:[#allocation5 + $0x258] sm:$0xff]
    %v155 = vld [vmem:[#allocation5 + $0x260] sm:$0xff]
    %v156 = vld [vmem:[#allocation5 + $0x268] sm:$0xff]
    %v157 = vld [vmem:[#allocation5 + $0x270] sm:$0xff]
    %v158 = vld [vmem:[#allocation5 + $0x278] sm:$0xff]
    %159 = vmatprep.subr.mxu0 %v96
    %160 = vmatpush1.msra.mxu0 %v95
    %161 = vmatprep.subr.mxu0 %v100
    %162 = vmatpush1.msra.mxu0 %v99
    %163 = vmatprep.subr.mxu0 %v104
    %164 = vmatpush1.msra.mxu0 %v103
    %165 = vmatprep.subr.mxu0 %v108
    %166 = vmatpush1.msra.mxu0 %v107
    %167 = vmatprep.subr.mxu0 %v112
    %168 = vmatpush1.msra.mxu0 %v111
    %169 = vmatprep.subr.mxu0 %v116
    %170 = vmatpush1.msra.mxu0 %v115
    %171 = vmatprep.subr.mxu0 %v120
    %172 = vmatpush1.msra.mxu0 %v119
    %173 = vmatprep.subr.mxu0 %v124
    %174 = vmatpush1.msra.mxu0 %v123
    %175 = vmatprep.subr.mxu0 %v128
    %176 = vmatpush1.msra.mxu0 %v127
    %177 = vmatprep.subr.mxu0 %v132
    %178 = vmatpush1.msra.mxu0 %v131
    %179 = vmatprep.subr.mxu0 %v136
    %180 = vmatpush1.msra.mxu0 %v135
    %181 = vmatprep.subr.mxu0 %v140
    %182 = vmatpush1.msra.mxu0 %v139
    %183 = vmatprep.subr.mxu0 %v144
    %184 = vmatpush1.msra.mxu0 %v143
    %185 = vmatprep.subr.mxu0 %v148
    %186 = vmatpush1.msra.mxu0 %v147
    %187 = vmatprep.subr.mxu0 %v152
    %188 = vmatpush1.msra.mxu0 %v151
    %189 = vmatprep.subr.mxu0 %v156
    %190 = vmatpush1.msra.mxu0 %v155
    %191 = vmatprep.subr.mxu0 0.0
    %192 = vmatpush1.msra.mxu0 0.0
    %193 = vmatprep.subr.mxu0 0.0
    %194 = vmatpush1.msra.mxu0 0.0
    %195 = vmatprep.subr.mxu0 0.0
    %196 = vmatpush1.msra.mxu0 0.0
    %197 = vmatprep.subr.mxu0 0.0
    %198 = vmatpush1.msra.mxu0 0.0
    %199 = vmatprep.subr.mxu0 0.0
    %200 = vmatpush1.msra.mxu0 0.0
    %201 = vmatprep.subr.mxu0 0.0
    %202 = vmatpush1.msra.mxu0 0.0
    %203 = vmatprep.subr.mxu0 0.0
    %204 = vmatpush1.msra.mxu0 0.0
    %205 = vmatprep.subr.mxu0 0.0
    %206 = vmatpush1.msra.mxu0 0.0
    %207 = vmatprep.subr.mxu0 0.0
    %208 = vmatpush1.msra.mxu0 0.0
    %209 = vmatprep.subr.mxu0 0.0
    %210 = vmatpush1.msra.mxu0 0.0
    %211 = vmatprep.subr.mxu0 0.0
    %212 = vmatpush1.msra.mxu0 0.0
    %213 = vmatprep.subr.mxu0 0.0
    %214 = vmatpush1.msra.mxu0 0.0
    %215 = vmatprep.subr.mxu0 0.0
    %216 = vmatpush1.msra.mxu0 0.0
    %217 = vmatprep.subr.mxu0 0.0
    %218 = vmatpush1.msra.mxu0 0.0
    %219 = vmatprep.subr.mxu0 0.0
    %220 = vmatpush1.msra.mxu0 0.0
    %221 = vmatprep.subr.mxu0 0.0
    %222 = vmatpush1.msra.mxu0 0.0
    %223 = vmatprep.mubr.f32.mxu0 0.0
    %224 = vmatmul.mubr.f32.gmra.mrb[0].mxu0 %v74
    %v225 = vpop.f32.mrb[0].mxu0
    %v226 = vadd.f32 0.0, %v225
    %v227 = vpop.f32.mrb[0].mxu0
    %v228 = vadd.f32 0.0, %v227
    %229 = vdwg.mxu0
    %230 = vmatprep.subr.mxu0 %v98
    %231 = vmatpush1.msra.mxu0 %v97
    %232 = vmatprep.subr.mxu0 %v102
    %233 = vmatpush1.msra.mxu0 %v101
    %234 = vmatprep.subr.mxu0 %v106
    %235 = vmatpush1.msra.mxu0 %v105
    %236 = vmatprep.subr.mxu0 %v110
    %237 = vmatpush1.msra.mxu0 %v109
    %238 = vmatprep.subr.mxu0 %v114
    %239 = vmatpush1.msra.mxu0 %v113
    %240 = vmatprep.subr.mxu0 %v118
    %241 = vmatpush1.msra.mxu0 %v117
    %242 = vmatprep.subr.mxu0 %v122
    %243 = vmatpush1.msra.mxu0 %v121
    %244 = vmatprep.subr.mxu0 %v126
    %245 = vmatpush1.msra.mxu0 %v125
    %246 = vmatprep.subr.mxu0 %v130
    %247 = vmatpush1.msra.mxu0 %v129
    %248 = vmatprep.subr.mxu0 %v134
    %249 = vmatpush1.msra.mxu0 %v133
    %250 = vmatprep.subr.mxu0 %v138
    %251 = vmatpush1.msra.mxu0 %v137
    %252 = vmatprep.subr.mxu0 %v142
    %253 = vmatpush1.msra.mxu0 %v141
    %254 = vmatprep.subr.mxu0 %v146
    %255 = vmatpush1.msra.mxu0 %v145
    %256 = vmatprep.subr.mxu0 %v150
    %257 = vmatpush1.msra.mxu0 %v149
    %258 = vmatprep.subr.mxu0 %v154
    %259 = vmatpush1.msra.mxu0 %v153
    %260 = vmatprep.subr.mxu0 %v158
    %261 = vmatpush1.msra.mxu0 %v157
    %262 = vmatprep.subr.mxu0 0.0
    %263 = vmatpush1.msra.mxu0 0.0
    %264 = vmatprep.subr.mxu0 0.0
    %265 = vmatpush1.msra.mxu0 0.0
    %266 = vmatprep.subr.mxu0 0.0
    %267 = vmatpush1.msra.mxu0 0.0
    %268 = vmatprep.subr.mxu0 0.0
    %269 = vmatpush1.msra.mxu0 0.0
    %270 = vmatprep.subr.mxu0 0.0
    %271 = vmatpush1.msra.mxu0 0.0
    %272 = vmatprep.subr.mxu0 0.0
    %273 = vmatpush1.msra.mxu0 0.0
    %274 = vmatprep.subr.mxu0 0.0
    %275 = vmatpush1.msra.mxu0 0.0
    %276 = vmatprep.subr.mxu0 0.0
    %277 = vmatpush1.msra.mxu0 0.0
    %278 = vmatprep.subr.mxu0 0.0
    %279 = vmatpush1.msra.mxu0 0.0
    %280 = vmatprep.subr.mxu0 0.0
    %281 = vmatpush1.msra.mxu0 0.0
    %282 = vmatprep.subr.mxu0 0.0
    %283 = vmatpush1.msra.mxu0 0.0
    %284 = vmatprep.subr.mxu0 0.0
    %285 = vmatpush1.msra.mxu0 0.0
    %286 = vmatprep.subr.mxu0 0.0
    %287 = vmatpush1.msra.mxu0 0.0
    %288 = vmatprep.subr.mxu0 0.0
    %289 = vmatpush1.msra.mxu0 0.0
    %290 = vmatprep.subr.mxu0 0.0
    %291 = vmatpush1.msra.mxu0 0.0
    %292 = vmatprep.subr.mxu0 0.0
    %293 = vmatpush1.msra.mxu0 0.0
    %294 = vmatprep.mubr.f32.mxu0 0.0
    %295 = vmatmul.mubr.f32.gmra.mrb[0].mxu0 %v74
    %v296 = vpop.f32.mrb[0].mxu0
    %v297 = vadd.f32 0.0, %v296
    %v298 = vpop.f32.mrb[0].mxu0
    %v299 = vadd.f32 0.0, %v298
    %300 = vdwg.mxu0
    %vm301 = vcmask 261120
    %v303 = vsel %vm301, %v66, 0
    %305 = vmatprep.subr.mxu0 %v80
    %306 = vmatpush1.msra.mxu0 %v79
    %307 = vmatprep.subr.mxu0 %v84
    %308 = vmatpush1.msra.mxu0 %v83
    %309 = vmatprep.subr.mxu0 %v88
    %310 = vmatpush1.msra.mxu0 %v87
    %311 = vmatprep.subr.mxu0 %v92
    %312 = vmatpush1.msra.mxu0 %v91
    %313 = vmatprep.subr.mxu0 0.0
    %314 = vmatpush1.msra.mxu0 0.0
    %315 = vmatprep.subr.mxu0 0.0
    %316 = vmatpush1.msra.mxu0 0.0
    %317 = vmatprep.subr.mxu0 0.0
    %318 = vmatpush1.msra.mxu0 0.0
    %319 = vmatprep.subr.mxu0 0.0
    %320 = vmatpush1.msra.mxu0 0.0
    %321 = vmatprep.subr.mxu0 0.0
    %322 = vmatpush1.msra.mxu0 0.0
    %323 = vmatprep.subr.mxu0 0.0
    %324 = vmatpush1.msra.mxu0 0.0
    %325 = vmatprep.subr.mxu0 0.0
    %326 = vmatpush1.msra.mxu0 0.0
    %327 = vmatprep.subr.mxu0 0.0
    %328 = vmatpush1.msra.mxu0 0.0
    %329 = vmatprep.subr.mxu0 0.0
    %330 = vmatpush1.msra.mxu0 0.0
    %331 = vmatprep.subr.mxu0 0.0
    %332 = vmatpush1.msra.mxu0 0.0
    %333 = vmatprep.subr.mxu0 0.0
    %334 = vmatpush1.msra.mxu0 0.0
    %335 = vmatprep.subr.mxu0 0.0
    %336 = vmatpush1.msra.mxu0 0.0
    %337 = vmatprep.subr.mxu0 0.0
    %338 = vmatpush1.msra.mxu0 0.0
    %339 = vmatprep.subr.mxu0 0.0
    %340 = vmatpush1.msra.mxu0 0.0
    %341 = vmatprep.subr.mxu0 0.0
    %342 = vmatpush1.msra.mxu0 0.0
    %343 = vmatprep.subr.mxu0 0.0
    %344 = vmatpush1.msra.mxu0 0.0
    %345 = vmatprep.subr.mxu0 0.0
    %346 = vmatpush1.msra.mxu0 0.0
    %347 = vmatprep.subr.mxu0 0.0
    %348 = vmatpush1.msra.mxu0 0.0
    %349 = vmatprep.subr.mxu0 0.0
    %350 = vmatpush1.msra.mxu0 0.0
    %351 = vmatprep.subr.mxu0 0.0
    %352 = vmatpush1.msra.mxu0 0.0
    %353 = vmatprep.subr.mxu0 0.0
    %354 = vmatpush1.msra.mxu0 0.0
    %355 = vmatprep.subr.mxu0 0.0
    %356 = vmatpush1.msra.mxu0 0.0
    %357 = vmatprep.subr.mxu0 0.0
    %358 = vmatpush1.msra.mxu0 0.0
    %359 = vmatprep.subr.mxu0 0.0
    %360 = vmatpush1.msra.mxu0 0.0
    %361 = vmatprep.subr.mxu0 0.0
    %362 = vmatpush1.msra.mxu0 0.0
    %363 = vmatprep.subr.mxu0 0.0
    %364 = vmatpush1.msra.mxu0 0.0
    %365 = vmatprep.subr.mxu0 0.0
    %366 = vmatpush1.msra.mxu0 0.0
    %367 = vmatprep.subr.mxu0 0.0
    %368 = vmatpush1.msra.mxu0 0.0
    %369 = vmatprep.mubr.f32.mxu0 0.0
    %370 = vmatmul.mubr.f32.gmra.mrb[0].mxu0 %v303
    %v371 = vpop.f32.mrb[0].mxu0
    %v372 = vadd.f32 %v226, %v371
    %v373 = vpop.f32.mrb[0].mxu0
    %v374 = vadd.f32 %v228, %v373
    %375 = vdwg.mxu0
    %376 = vmatprep.subr.mxu0 %v82
    %377 = vmatpush1.msra.mxu0 %v81
    %378 = vmatprep.subr.mxu0 %v86
    %379 = vmatpush1.msra.mxu0 %v85
    %380 = vmatprep.subr.mxu0 %v90
    %381 = vmatpush1.msra.mxu0 %v89
    %382 = vmatprep.subr.mxu0 %v94
    %383 = vmatpush1.msra.mxu0 %v93
    %384 = vmatprep.subr.mxu0 0.0
    %385 = vmatpush1.msra.mxu0 0.0
    %386 = vmatprep.subr.mxu0 0.0
    %387 = vmatpush1.msra.mxu0 0.0
    %388 = vmatprep.subr.mxu0 0.0
    %389 = vmatpush1.msra.mxu0 0.0
    %390 = vmatprep.subr.mxu0 0.0
    %391 = vmatpush1.msra.mxu0 0.0
    %392 = vmatprep.subr.mxu0 0.0
    %393 = vmatpush1.msra.mxu0 0.0
    %394 = vmatprep.subr.mxu0 0.0
    %395 = vmatpush1.msra.mxu0 0.0
    %396 = vmatprep.subr.mxu0 0.0
    %397 = vmatpush1.msra.mxu0 0.0
    %398 = vmatprep.subr.mxu0 0.0
    %399 = vmatpush1.msra.mxu0 0.0
    %400 = vmatprep.subr.mxu0 0.0
    %401 = vmatpush1.msra.mxu0 0.0
    %402 = vmatprep.subr.mxu0 0.0
    %403 = vmatpush1.msra.mxu0 0.0
    %404 = vmatprep.subr.mxu0 0.0
    %405 = vmatpush1.msra.mxu0 0.0
    %406 = vmatprep.subr.mxu0 0.0
    %407 = vmatpush1.msra.mxu0 0.0
    %408 = vmatprep.subr.mxu0 0.0
    %409 = vmatpush1.msra.mxu0 0.0
    %410 = vmatprep.subr.mxu0 0.0
    %411 = vmatpush1.msra.mxu0 0.0
    %412 = vmatprep.subr.mxu0 0.0
    %413 = vmatpush1.msra.mxu0 0.0
    %414 = vmatprep.subr.mxu0 0.0
    %415 = vmatpush1.msra.mxu0 0.0
    %416 = vmatprep.subr.mxu0 0.0
    %417 = vmatpush1.msra.mxu0 0.0
    %418 = vmatprep.subr.mxu0 0.0
    %419 = vmatpush1.msra.mxu0 0.0
    %420 = vmatprep.subr.mxu0 0.0
    %421 = vmatpush1.msra.mxu0 0.0
    %422 = vmatprep.subr.mxu0 0.0
    %423 = vmatpush1.msra.mxu0 0.0
    %424 = vmatprep.subr.mxu0 0.0
    %425 = vmatpush1.msra.mxu0 0.0
    %426 = vmatprep.subr.mxu0 0.0
    %427 = vmatpush1.msra.mxu0 0.0
    %428 = vmatprep.subr.mxu0 0.0
    %429 = vmatpush1.msra.mxu0 0.0
    %430 = vmatprep.subr.mxu0 0.0
    %431 = vmatpush1.msra.mxu0 0.0
    %432 = vmatprep.subr.mxu0 0.0
    %433 = vmatpush1.msra.mxu0 0.0
    %434 = vmatprep.subr.mxu0 0.0
    %435 = vmatpush1.msra.mxu0 0.0
    %436 = vmatprep.subr.mxu0 0.0
    %437 = vmatpush1.msra.mxu0 0.0
    %438 = vmatprep.subr.mxu0 0.0
    %439 = vmatpush1.msra.mxu0 0.0
    %440 = vmatprep.mubr.f32.mxu0 0.0
    %441 = vmatmul.mubr.f32.gmra.mrb[0].mxu0 %v303
    %v442 = vpop.f32.mrb[0].mxu0
    %v443 = vadd.f32 %v297, %v442
    %v444 = vpop.f32.mrb[0].mxu0
    %v445 = vadd.f32 %v299, %v444
    %446 = vdwg.mxu0
    %v447 = vld [vmem:[%s4] sm:$0xf]
    %v449 = vlaneseq
    %v450 = vshrl.u32 %v449, 7
    %v451 = vsub.s32 0, %v450
    %v452 = vrot.slane %v447, %v451
    %v453 = vlaneseq
    %v454 = vshrl.u32 %v453, 7
    %v455 = vsub.s32 1, %v454
    %v456 = vrot.slane %v447, %v455
    %v457 = vlaneseq
    %v458 = vshrl.u32 %v457, 7
    %v459 = vsub.s32 2, %v458
    %v460 = vrot.slane %v447, %v459
    %v461 = vlaneseq
    %v462 = vshrl.u32 %v461, 7
    %v463 = vsub.s32 3, %v462
    %v464 = vrot.slane %v447, %v463
    %v469 = vadd.f32 %v372, %v452
    %v470 = vadd.f32 %v374, %v456
    %v471 = vadd.f32 %v443, %v460
    %v472 = vadd.f32 %v445, %v464
    %v473 = vxor.u32 %v469, 2147483648
    %v474 = vmul.f32 %v473, 1.442695
    %v475 = vpow.pop %v474
    %v476 = vadd.f32 %v475, 1.0
    %v477 = vrcp.pop %v476
    %v478 = vmul.f32 1.0, %v477
    %v479 = vxor.u32 %v470, 2147483648
    %v480 = vmul.f32 %v479, 1.442695
    %v481 = vpow.pop %v480
    %v482 = vadd.f32 %v481, 1.0
    %v483 = vrcp.pop %v482
    %v484 = vmul.f32 1.0, %v483
    %v485 = vtanh.pop %v471
    %v486 = vxor.u32 %v472, 2147483648
    %v487 = vmul.f32 %v486, 1.442695
    %v488 = vpow.pop %v487
    %v489 = vadd.f32 %v488, 1.0
    %v490 = vrcp.pop %v489
    %v491 = vmul.f32 1.0, %v490
    %v492 = vmul.f32 %v484, %v78
    %v493 = vmul.f32 %v478, %v485
    %v494 = vadd.f32 %v492, %v493
    %v495 = vtanh.pop %v494
    %v496 = vmul.f32 %v491, %v495
    %v497 = vld [vmem:[#allocation7] sm:$0xff]
    %v498 = vld [vmem:[#allocation7 + $0x8] sm:$0xff]
    %v499 = vld [vmem:[#allocation7 + $0x10] sm:$0xff]
    %v500 = vld [vmem:[#allocation7 + $0x18] sm:$0xff]
    %v501 = vld [vmem:[#allocation7 + $0x20] sm:$0xff]
    %v502 = vld [vmem:[#allocation7 + $0x28] sm:$0xff]
    %v503 = vld [vmem:[#allocation7 + $0x30] sm:$0xff]
    %v504 = vld [vmem:[#allocation7 + $0x38] sm:$0xff]
    %v505 = vld [vmem:[#allocation7 + $0x40] sm:$0xff]
    %v506 = vld [vmem:[#allocation7 + $0x48] sm:$0xff]
    %v507 = vld [vmem:[#allocation7 + $0x50] sm:$0xff]
    %v508 = vld [vmem:[#allocation7 + $0x58] sm:$0xff]
    %v509 = vld [vmem:[#allocation7 + $0x60] sm:$0xff]
    %v510 = vld [vmem:[#allocation7 + $0x68] sm:$0xff]
    %v511 = vld [vmem:[#allocation7 + $0x70] sm:$0xff]
    %v512 = vld [vmem:[#allocation7 + $0x78] sm:$0xff]
    %v513 = vld [vmem:[#allocation7 + $0x80] sm:$0xff]
    %v514 = vld [vmem:[#allocation7 + $0x88] sm:$0xff]
    %v515 = vld [vmem:[#allocation7 + $0x90] sm:$0xff]
    %v516 = vld [vmem:[#allocation7 + $0x98] sm:$0xff]
    %v517 = vld [vmem:[#allocation7 + $0xa0] sm:$0xff]
    %v518 = vld [vmem:[#allocation7 + $0xa8] sm:$0xff]
    %v519 = vld [vmem:[#allocation7 + $0xb0] sm:$0xff]
    %v520 = vld [vmem:[#allocation7 + $0xb8] sm:$0xff]
    %v521 = vld [vmem:[#allocation7 + $0xc0] sm:$0xff]
    %v522 = vld [vmem:[#allocation7 + $0xc8] sm:$0xff]
    %v523 = vld [vmem:[#allocation7 + $0xd0] sm:$0xff]
    %v524 = vld [vmem:[#allocation7 + $0xd8] sm:$0xff]
    %v525 = vld [vmem:[#allocation7 + $0xe0] sm:$0xff]
    %v526 = vld [vmem:[#allocation7 + $0xe8] sm:$0xff]
    %v527 = vld [vmem:[#allocation7 + $0xf0] sm:$0xff]
    %v528 = vld [vmem:[#allocation7 + $0xf8] sm:$0xff]
    %v529 = vld [vmem:[%s6] ss:$2 sm:$0x3]
    %v531 = vlaneseq
    %v532 = vshrl.u32 %v531, 7
    %v533 = vsub.s32 0, %v532
    %v534 = vrot.slane %v529, %v533
    %v535 = vlaneseq
    %v536 = vshrl.u32 %v535, 7
    %v537 = vsub.s32 1, %v536
    %v538 = vrot.slane %v529, %v537
    %541 = vmatprep.subr.mxu0 %v498
    %542 = vmatpush1.msra.mxu0 %v497
    %543 = vmatprep.subr.mxu0 %v500
    %544 = vmatpush1.msra.mxu0 %v499
    %545 = vmatprep.subr.mxu0 %v502
    %546 = vmatpush1.msra.mxu0 %v501
    %547 = vmatprep.subr.mxu0 %v504
    %548 = vmatpush1.msra.mxu0 %v503
    %549 = vmatprep.subr.mxu0 %v506
    %550 = vmatpush1.msra.mxu0 %v505
    %551 = vmatprep.subr.mxu0 %v508
    %552 = vmatpush1.msra.mxu0 %v507
    %553 = vmatprep.subr.mxu0 %v510
    %554 = vmatpush1.msra.mxu0 %v509
    %555 = vmatprep.subr.mxu0 %v512
    %556 = vmatpush1.msra.mxu0 %v511
    %557 = vmatprep.subr.mxu0 %v514
    %558 = vmatpush1.msra.mxu0 %v513
    %559 = vmatprep.subr.mxu0 %v516
    %560 = vmatpush1.msra.mxu0 %v515
    %561 = vmatprep.subr.mxu0 %v518
    %562 = vmatpush1.msra.mxu0 %v517
    %563 = vmatprep.subr.mxu0 %v520
    %564 = vmatpush1.msra.mxu0 %v519
    %565 = vmatprep.subr.mxu0 %v522
    %566 = vmatpush1.msra.mxu0 %v521
    %567 = vmatprep.subr.mxu0 %v524
    %568 = vmatpush1.msra.mxu0 %v523
    %569 = vmatprep.subr.mxu0 %v526
    %570 = vmatpush1.msra.mxu0 %v525
    %571 = vmatprep.subr.mxu0 %v528
    %572 = vmatpush1.msra.mxu0 %v527
    %573 = vmatprep.subr.mxu0 0.0
    %574 = vmatpush1.msra.mxu0 0.0
    %575 = vmatprep.subr.mxu0 0.0
    %576 = vmatpush1.msra.mxu0 0.0
    %577 = vmatprep.subr.mxu0 0.0
    %578 = vmatpush1.msra.mxu0 0.0
    %579 = vmatprep.subr.mxu0 0.0
    %580 = vmatpush1.msra.mxu0 0.0
    %581 = vmatprep.subr.mxu0 0.0
    %582 = vmatpush1.msra.mxu0 0.0
    %583 = vmatprep.subr.mxu0 0.0
    %584 = vmatpush1.msra.mxu0 0.0
    %585 = vmatprep.subr.mxu0 0.0
    %586 = vmatpush1.msra.mxu0 0.0
    %587 = vmatprep.subr.mxu0 0.0
    %588 = vmatpush1.msra.mxu0 0.0
    %589 = vmatprep.subr.mxu0 0.0
    %590 = vmatpush1.msra.mxu0 0.0
    %591 = vmatprep.subr.mxu0 0.0
    %592 = vmatpush1.msra.mxu0 0.0
    %593 = vmatprep.subr.mxu0 0.0
    %594 = vmatpush1.msra.mxu0 0.0
    %595 = vmatprep.subr.mxu0 0.0
    %596 = vmatpush1.msra.mxu0 0.0
    %597 = vmatprep.subr.mxu0 0.0
    %598 = vmatpush1.msra.mxu0 0.0
    %599 = vmatprep.subr.mxu0 0.0
    %600 = vmatpush1.msra.mxu0 0.0
    %601 = vmatprep.subr.mxu0 0.0
    %602 = vmatpush1.msra.mxu0 0.0
    %603 = vmatprep.subr.mxu0 0.0
    %604 = vmatpush1.msra.mxu0 0.0
    %605 = vmatprep.mubr.f32.mxu0 0.0
    %606 = vmatmul.mubr.f32.gmra.mrb[0].mxu0 %v496
    %v607 = vpop.f32.mrb[0].mxu0
    %v608 = vadd.f32 %v534, %v607
    %v609 = vpop.f32.mrb[0].mxu0
    %v610 = vadd.f32 %v538, %v609
    %611 = vdwg.mxu0
    %v612 = vlaneseq
    %v613 = vand.u32 %v612, 127
    %vm614 = vcmp.lt.s32.totalorder %v613, 6
    %v615 = vsel %vm614, %v608, -inf
    %vm616 = vcmask 1043456
    %v617 = vsel %vm616, %v615, -inf
    %618 = vmax.xlane.f32.xlu0 %v617
    %v619 = vpop.xlane.xlu0 %618
    %v620 = vsub.f32 %v615, %v619
    %v621 = vmul.f32 %v620, 1.442695
    %v622 = vpow.pop %v621
    %v623 = vsel %vm616, %v622, 0.0
    %624 = vadd.xlane.f32.xlu0 %v623
    %v625 = vpop.xlane.xlu0 %624
    %v626 = vrcp.pop %v625
    %v627 = vmul.f32 %v622, %v626
    %v628 = vmax.f32 %v610, 0.0
    %v629 = vld [vmem:[%s6 + $0x1] sm:$0x1]
    %v630 = vld [vmem:[%s6 + $0x3] sm:$0x1]
    %v631 = vlaneseq
    %v632 = vshrl.u32 %v631, 7
    %v633 = vsub.s32 0, %v632
    %v634 = vrot.slane %v629, %v633
    %v635 = vmul.f32 %v628, %v634
    %v636 = vsel %vm616, %v635, 0.0
    %637 = vadd.xlane.f32.xlu0 %v636
    %v638 = vpop.xlane.xlu0 %637
    %v639 = vlaneseq
    %v640 = vshrl.u32 %v639, 7
    %v641 = vsub.s32 0, %v640
    %v642 = vrot.slane %v630, %v641
    %v643 = vadd.f32 %v638, %v642
    %v648 = vcombine.low %v627, %v496
    %v649 = vcombine.low %v494, %v643
    %652 = vst [vmem:[#allocation8] sm:$0xff] %v648
    %653 = vst [vmem:[#allocation8 + $0x8] sm:$0xff] %v649
    // Predicated region
    $region42: #{tpu_custom_call.1} parent=1 // pred_check
      _
    $region43: #{tpu_custom_call.1} parent=1 // pred_check_branch
      %655 = sbr.rel (0) target = $region45
    $region44: #{tpu_custom_call.1} parent=1 // pred_region
      %s657 = ssub.s32 256, 256
      %658 = vsyncadd [#allocation4], %s657
      %s660 = sshll.u32 [#allocation8], 4
      %s661 = int_to_ptr.vmem [resolvable:$true] %s660
      %663 = dma.vmem_to_hbm [thread:$0]  %s661, 256, %s7, [#allocation4]
    $region45: #{tpu_custom_call.1} parent=1 // pred_fallthru
      _
    // Predicated region
    $region46: #{tpu_custom_call.1} parent=1 // pred_check
      _
    $region47: #{tpu_custom_call.1} parent=1 // pred_check_branch
      %665 = sbr.rel (0) target = $region49
    $region48: #{tpu_custom_call.1} parent=1 // pred_region
      %666 = dma.done [#allocation4], 256
    $region49: #{tpu_custom_call.1} parent=1 // pred_fallthru
      _
    %667 = vsyncpa [#allocation3], 1
    %668 = vsyncpa [#allocation6], 1
    %669 = vsyncpa [#allocation4], 1

</llo_original>
